<compile_context>
chip_gen: v7x
topology: tpu7x:2x2x1
jax: 0.10.0
libtpu: 0.0.40
codegen_flags: <defaults>
</compile_context>

<pallas_src>
import functools

import jax
import jax.numpy as jnp
from jax import lax
from jax.experimental import pallas as pl
from jax.experimental.pallas import tpu as pltpu

_LANE = 128


def _sublane(itemsize):
    # 8 rows for 4-byte dtypes, 16 for bf16.
    return max(8, 32 // max(int(itemsize), 1))


def _default_vmem_limit():
    """Generation-aware scoped-VMEM request (fits v5e/v6e 128 MiB and v7x 64 MiB)."""
    cap = None
    try:
        cap = getattr(pltpu.get_tpu_info(), "vmem_capacity_bytes", None)
    except Exception:
        cap = None
    if not cap:
        cap = 128 * 1024 * 1024
    return int(cap * 0.65)


def _choose_tiles(n_rows, n_classes, itemsize, vmem_limit_bytes):
    """Pick (row_tile, class_tile, split) from a bytes-per-step target and a
    VMEM working-set model:
        inputs : 2 (double-buffered) * class_tile * itemsize      per row
        temps  : ~24 B/element of f32 temporaries (x_f32/select/exp/iota)
        target : 2 buffers * 128-lane-padded int32                per row
        scratch: 3 per-row f32 accumulators (class-split path only)
    """
    sub = _sublane(itemsize)
    budget = int(vmem_limit_bytes * 0.75)        # headroom for compiler scratch
    target_tile_bytes = 4 * 1024 * 1024          # aim for ~2-8 MiB logits tiles
    per_elem = 2 * itemsize + 24
    fixed_per_row = 2 * _LANE * 4
    scratch_per_row = 3 * _LANE * 4

    rows_full = budget // (n_classes * per_elem + fixed_per_row)
    if rows_full >= sub or n_classes <= _LANE:
        rows_target = max(sub, target_tile_bytes // max(n_classes * itemsize, 1))
        row_tile = max(sub, min(rows_full, rows_target))
        row_tile = (row_tile // sub) * sub
        if row_tile >= n_rows:
            row_tile = n_rows
        return row_tile, n_classes, False

    # Huge class count: split the class axis, keep a decent row tile.
    row_tile = min(256, n_rows)
    if row_tile < n_rows:
        row_tile = max(sub, (row_tile // sub) * sub)
    class_tile = (budget - row_tile * (fixed_per_row + scratch_per_row)) // (
        row_tile * per_elem)
    class_tile = min(class_tile,
                     max(_LANE, target_tile_bytes // max(row_tile * itemsize, 1)))
    class_tile = max(_LANE, (class_tile // _LANE) * _LANE)
    if class_tile >= n_classes:
        return row_tile, n_classes, False
    return row_tile, int(class_tile), True


def _write_tile_loss(loss_ref, row_loss, *, n_rows, mask_rows):
    """Reduce one row-tile's per-row losses to a lane-dense (1,128) partial sum."""
    if mask_rows:
        row_tile = row_loss.shape[0]
        ridx = (pl.program_id(0) * row_tile
                + lax.broadcasted_iota(jnp.int32, row_loss.shape, 0))
        row_loss = jnp.where(ridx < n_rows, row_loss, 0.0)   # drop padded rows
    tile_sum = jnp.sum(row_loss, axis=0, keepdims=True)       # (1, 1)
    lane = lax.broadcasted_iota(jnp.int32, (1, _LANE), 1)
    loss_ref[...] = jnp.where(lane == 0, tile_sum, 0.0)       # full-lane store


def _label_smooth_kernel(x_ref, t_ref, loss_ref, *scratch, smoothing, n_rows,
                         n_classes, class_split, mask_rows, mask_classes):
    class_tile = x_ref.shape[1]
    x_raw = x_ref[...]                              # (TR, TC) raw dtype
    x = x_raw.astype(jnp.float32)                   # upcast once, in-kernel
    t = t_ref[...]                                  # (TR, 1) int32

    on = jnp.float32(1.0 - float(smoothing))
    if n_classes > 1:
        off = jnp.float32(float(smoothing) / (n_classes - 1.0))
    else:
        off = jnp.float32(0.0)

    j = pl.program_id(1) if class_split else 0
    cls = lax.broadcasted_iota(jnp.int32, x.shape, 1)
    if class_split:
        cls = cls + j * class_tile
    w = jnp.where(cls == t, on, off)                # (TR, TC) smoothed weights

    if mask_classes:
        valid = cls < n_classes
        x = jnp.where(valid, x, -jnp.inf)
        m_blk = jnp.max(x, axis=-1, keepdims=True)
        wx_row = jnp.sum(jnp.where(valid, w * x, 0.0), axis=-1, keepdims=True)
    else:
        # Row max on the raw dtype (exact for max; halves bf16 vreg pressure).
        m_blk = jnp.max(x_raw, axis=-1, keepdims=True).astype(jnp.float32)
        wx_row = jnp.sum(w * x, axis=-1, keepdims=True)

    if not class_split:
        # Single class block: plain stable logsumexp, no scratch needed.
        lse = m_blk + jnp.log(jnp.sum(jnp.exp(x - m_blk), axis=-1, keepdims=True))
        _write_tile_loss(loss_ref, lse - wx_row, n_rows=n_rows, mask_rows=mask_rows)
    else:
        m_sc, l_sc, wx_sc = scratch

        @pl.when(j == 0)
        def _():
            m_sc[...] = jnp.full_like(m_sc, -jnp.inf)
            l_sc[...] = jnp.zeros_like(l_sc)
            wx_sc[...] = jnp.zeros_like(wx_sc)

        # Online logsumexp + running weighted-logit sum across class blocks.
        m_prev = m_sc[...]
        m_new = jnp.maximum(m_prev, m_blk)
        l_sc[...] = (l_sc[...] * jnp.exp(m_prev - m_new)
                     + jnp.sum(jnp.exp(x - m_new), axis=-1, keepdims=True))
        wx_sc[...] = wx_sc[...] + wx_row
        m_sc[...] = m_new

        @pl.when(j == pl.num_programs(1) - 1)
        def _():
            lse = m_sc[...] + jnp.log(l_sc[...])
            _write_tile_loss(loss_ref, lse - wx_sc[...],
                             n_rows=n_rows, mask_rows=mask_rows)


def label_smooth_loss(logits, target, smoothing=0.0, *, row_tile=None,
                      class_tile=None, vmem_limit_bytes=None):
    """logits: (..., C) float (f32/bf16), target: (...,) int. Returns scalar f32."""
    n_classes = logits.shape[-1]
    logits2d = logits.reshape(-1, n_classes)
    n_rows = logits2d.shape[0]
    target2d = target.reshape(-1).astype(jnp.int32).reshape(n_rows, 1)

    if vmem_limit_bytes is None:
        vmem_limit_bytes = _default_vmem_limit()

    itemsize = jnp.dtype(logits.dtype).itemsize
    sub = _sublane(itemsize)
    auto_rt, auto_ct, _ = _choose_tiles(n_rows, n_classes, itemsize, vmem_limit_bytes)

    rt = auto_rt if row_tile is None else int(row_tile)
    ct = auto_ct if class_tile is None else int(class_tile)
    rt = min(rt, n_rows)
    if rt < n_rows:
        rt = max(sub, (rt // sub) * sub)
    ct = min(ct, n_classes)
    if ct < n_classes:
        ct = max(_LANE, (ct // _LANE) * _LANE)
    split = ct < n_classes

    num_row_tiles = pl.cdiv(n_rows, rt)
    num_class_tiles = pl.cdiv(n_classes, ct)
    mask_rows = (n_rows % rt) != 0
    mask_classes = split and (n_classes % ct) != 0

    kernel = functools.partial(
        _label_smooth_kernel, smoothing=float(smoothing), n_rows=n_rows,
        n_classes=n_classes, class_split=split, mask_rows=mask_rows,
        mask_classes=mask_classes)

    if split:
        grid = (num_row_tiles, num_class_tiles)           # class (reduction) axis last
        in_specs = [pl.BlockSpec((rt, ct), lambda i, j: (i, j)),
                    pl.BlockSpec((rt, 1), lambda i, j: (i, 0))]
        out_specs = pl.BlockSpec((1, _LANE), lambda i, j: (i, 0))
        scratch_shapes = [pltpu.VMEM((rt, 1), jnp.float32)] * 3
        dims = ("parallel", "arbitrary")
    else:
        grid = (num_row_tiles,)
        in_specs = [pl.BlockSpec((rt, n_classes), lambda i: (i, 0)),
                    pl.BlockSpec((rt, 1), lambda i: (i, 0))]
        out_specs = pl.BlockSpec((1, _LANE), lambda i: (i, 0))
        scratch_shapes = []
        dims = ("parallel",)

    # Default 2-deep pipeline; pl.Buffered(3) on the logits spec only if an
    # xprof trace shows exposed DMA (on v7x a bigger 2-deep tile is better).
    partial_sums = pl.pallas_call(
        kernel,
        out_shape=jax.ShapeDtypeStruct((num_row_tiles, _LANE), jnp.float32),
        grid=grid,
        in_specs=in_specs,
        out_specs=out_specs,
        scratch_shapes=scratch_shapes,
        compiler_params=pltpu.CompilerParams(
            dimension_semantics=dims,
            vmem_limit_bytes=int(vmem_limit_bytes)),
    )(logits2d, target2d)

    # Tiny final reduce outside the kernel (one value per row tile; other lanes 0).
    return jnp.sum(partial_sums) / jnp.float32(n_rows)


def _reference(logits, target, smoothing):
    # Pure-JAX reference mirroring the PyTorch forward.
    n_classes = logits.shape[-1]
    x = logits.reshape(-1, n_classes).astype(jnp.float32)
    t = target.reshape(-1)
    log_prob = jax.nn.log_softmax(x, axis=-1)
    w = jnp.full(x.shape, smoothing / (n_classes - 1.0), dtype=jnp.float32)
    w = w.at[jnp.arange(x.shape[0]), t].set(1.0 - smoothing)
    return jnp.mean(jnp.sum(-w * log_prob, axis=-1))


if __name__ == "__main__":
    key = jax.random.PRNGKey(0)
    smoothing = 0.1
    k1, k2, k3, k4, k5, k6, k7, k8 = jax.random.split(key, 8)

    # Case 1: small f32, single tile, auto-chosen tiles.
    logits = jax.random.normal(k1, (8, 32), dtype=jnp.float32)
    target = jax.random.randint(k2, (8,), 0, 32, dtype=jnp.int32)
    loss = jax.block_until_ready(label_smooth_loss(logits, target, smoothing))
    ref = _reference(logits, target, smoothing)
    assert jnp.allclose(loss, ref, atol=1e-5, rtol=1e-5), (loss, ref)

    # Case 2: forced small row tile -> multi-step row grid with a partial last
    # row block (exercises padded-row masking of the per-tile partial sums).
    logits = jax.random.normal(k3, (20, 128), dtype=jnp.float32)
    target = jax.random.randint(k4, (20,), 0, 128, dtype=jnp.int32)
    loss = jax.block_until_ready(
        label_smooth_loss(logits, target, smoothing, row_tile=8))
    ref = _reference(logits, target, smoothing)
    assert jnp.allclose(loss, ref, atol=1e-5, rtol=1e-5), (loss, ref)

    # Case 3: forced class split (online logsumexp path) with a partial last
    # class block (C=160 over 128-wide class tiles).
    logits = jax.random.normal(k5, (16, 160), dtype=jnp.float32)
    target = jax.random.randint(k6, (16,), 0, 160, dtype=jnp.int32)
    loss = jax.block_until_ready(
        label_smooth_loss(logits, target, smoothing, row_tile=8, class_tile=128))
    ref = _reference(logits, target, smoothing)
    assert jnp.allclose(loss, ref, atol=1e-5, rtol=1e-5), (loss, ref)

    # Case 4: bf16 logits streamed without pre-casting (upcast in-kernel).
    logits = jax.random.normal(k7, (32, 256), dtype=jnp.float32).astype(jnp.bfloat16)
    target = jax.random.randint(k8, (32,), 0, 256, dtype=jnp.int32)
    loss = jax.block_until_ready(label_smooth_loss(logits, target, smoothing))
    ref = _reference(logits.astype(jnp.float32), target, smoothing)
    assert jnp.allclose(loss, ref, atol=1e-4, rtol=1e-4), (loss, ref)

    print("KERNEL_OK")
</pallas_src>

<mosaic_0001>
module attributes {stable_mosaic.version = 11 : i64} {
  func.func @_label_smooth_kernel(%arg0: i32, %arg1: memref<8x32xf32, #tpu.memory_space<vmem>>, %arg2: memref<8x1xi32, #tpu.memory_space<vmem>>, %arg3: memref<1x128xf32, #tpu.memory_space<vmem>>) attributes {dimension_semantics = [#tpu.dimension_semantics<parallel>], iteration_bounds = array<i64: 1>, scalar_prefetch = 0 : i64, scratch_operands = 0 : i64, tpu.core_type = #tpu.core_type<tc>, window_params = [{transform_indices = @transform_0, window_bounds = array<i64: 8, 32>}, {transform_indices = @transform_1, window_bounds = array<i64: 8, 1>}, {transform_indices = @transform_2, window_bounds = array<i64: 1, 128>}]} {
    %c0 = arith.constant 0 : index
    %c0_0 = arith.constant 0 : index
    %0 = vector.load %arg1[%c0, %c0_0] : memref<8x32xf32, #tpu.memory_space<vmem>>, vector<8x32xf32>
    %c0_1 = arith.constant 0 : index
    %c0_2 = arith.constant 0 : index
    %1 = vector.load %arg2[%c0_1, %c0_2] : memref<8x1xi32, #tpu.memory_space<vmem>>, vector<8x1xi32>
    %2 = tpu.iota {dimensions = array<i32: 1>} : vector<8x32xi32>
    %3 = vector.broadcast %1 : vector<8x1xi32> to vector<8x32xi32>
    %4 = arith.cmpi eq, %2, %3 : vector<8x32xi32>
    %cst = arith.constant 0.899999976 : f32
    %cst_3 = arith.constant 0.0032258064 : f32
    %5 = vector.broadcast %cst : f32 to vector<8x32xf32>
    %6 = vector.broadcast %cst_3 : f32 to vector<8x32xf32>
    %7 = arith.select %4, %5, %6 : vector<8x32xi1>, vector<8x32xf32>
    %cst_4 = arith.constant dense<0xFF800000> : vector<8xf32>
    %8 = vector.multi_reduction <maximumf>, %0, %cst_4 [1] : vector<8x32xf32> to vector<8xf32>
    %9 = vector.shape_cast %8 : vector<8xf32> to vector<8x1xf32>
    %10 = arith.mulf %7, %0 : vector<8x32xf32>
    %cst_5 = arith.constant dense<0.000000e+00> : vector<8xf32>
    %11 = vector.multi_reduction <add>, %10, %cst_5 [1] : vector<8x32xf32> to vector<8xf32>
    %12 = vector.shape_cast %11 : vector<8xf32> to vector<8x1xf32>
    %13 = vector.broadcast %9 : vector<8x1xf32> to vector<8x32xf32>
    %14 = arith.subf %0, %13 : vector<8x32xf32>
    %15 = math.exp %14 : vector<8x32xf32>
    %cst_6 = arith.constant dense<0.000000e+00> : vector<8xf32>
    %16 = vector.multi_reduction <add>, %15, %cst_6 [1] : vector<8x32xf32> to vector<8xf32>
    %17 = vector.shape_cast %16 : vector<8xf32> to vector<8x1xf32>
    %18 = math.log %17 : vector<8x1xf32>
    %19 = arith.addf %9, %18 : vector<8x1xf32>
    %20 = arith.subf %19, %12 : vector<8x1xf32>
    %cst_7 = arith.constant dense<0.000000e+00> : vector<1xf32>
    %21 = vector.multi_reduction <add>, %20, %cst_7 [0] : vector<8x1xf32> to vector<1xf32>
    %22 = vector.shape_cast %21 : vector<1xf32> to vector<1x1xf32>
    %23 = tpu.iota {dimensions = array<i32: 1>} : vector<1x128xi32>
    %c0_i32 = arith.constant 0 : i32
    %24 = vector.broadcast %c0_i32 : i32 to vector<1x128xi32>
    %25 = arith.cmpi eq, %23, %24 : vector<1x128xi32>
    %cst_8 = arith.constant 0.000000e+00 : f32
    %26 = vector.shape_cast %22 : vector<1x1xf32> to vector<1x1xf32>
    %27 = vector.broadcast %26 : vector<1x1xf32> to vector<1x128xf32>
    %28 = vector.broadcast %cst_8 : f32 to vector<1x128xf32>
    %29 = arith.select %25, %27, %28 : vector<1x128xi1>, vector<1x128xf32>
    %c0_9 = arith.constant 0 : index
    %c0_10 = arith.constant 0 : index
    %30 = vector.load %arg3[%c0_9, %c0_10] : memref<1x128xf32, #tpu.memory_space<vmem>>, vector<1x128xf32>
    tpu.vector_store %arg3[%c0_9, %c0_10], %29 {strides = array<i32>} : memref<1x128xf32, #tpu.memory_space<vmem>>, vector<1x128xf32>,
    return
  }
  func.func @transform_0(%arg0: i32) -> (i32, i32) {
    %c0_i32 = arith.constant 0 : i32
    %c0_i32_0 = arith.constant 0 : i32
    return %arg0, %c0_i32 : i32, i32
  }
  func.func @transform_1(%arg0: i32) -> (i32, i32) {
    %c0_i32 = arith.constant 0 : i32
    %c0_i32_0 = arith.constant 0 : i32
    return %arg0, %c0_i32 : i32, i32
  }
  func.func @transform_2(%arg0: i32) -> (i32, i32) {
    %c0_i32 = arith.constant 0 : i32
    %c0_i32_0 = arith.constant 0 : i32
    return %arg0, %c0_i32 : i32, i32
  }
}

</mosaic_0001>

<llo_original>
// kernel: tpu_custom_call.1
$region0: #{tpu_custom_call.1}
  #allocation0 [shape = 'u32[]', space=smem, size = 0x4, offset = 0x4, fixed_abs, tag = 'smem constant byte address 0x4 - core index']
  #allocation1 [shape = 'u32[144,128]{1,0:T(1,128)}', space=vmem, size = 0x12000, scoped, tag = 'internal scratch']
  %s0 = inlined_call_operand.hbm [shape: f32[8,32], index: 0, kind: input, shape index: {}]
  %s1 = inlined_call_operand.hbm [shape: s32[8,1], index: 1, kind: input, shape index: {}]
  %s2 = inlined_call_operand.hbm [shape: f32[1,128], index: 2, kind: output, shape index: {}]
  %s3 = sld [smem:[#allocation0]]
  $region26: #{tpu_custom_call.1} parent=0
    _
  %s5 = ssub.s32 1, %s3
  %s6 = scalar_select 0, %s5, %s3
  $region1: #{tpu_custom_call.1} parent=0
    #allocation2 [shape = 'u8[4096]{0}', space=vmem, size = 0x1000, scoped, tag = 'input window, operand 0, single buffered']
    #allocation3 [shape = 's32[1]{0}', space=sflag, size = 0x4, scoped, tag = 'scoped memory for tpu_custom_call.1']
    #allocation4 [shape = 's32[1]{0}', space=sflag, size = 0x4, scoped, tag = 'scoped memory for tpu_custom_call.1']
    #allocation5 [shape = 'u8[4096]{0}', space=vmem, size = 0x1000, scoped, tag = 'input window, operand 1, single buffered']
    #allocation6 [shape = 's32[1]{0}', space=sflag, size = 0x4, scoped, tag = 'scoped memory for tpu_custom_call.1']
    #allocation7 [shape = 'u8[512]{0}', space=vmem, size = 0x400, scoped, tag = 'output window, operand 0, single buffered']
    %7 = vsyncpa [#allocation3], 0
    %8 = vsyncpa [#allocation6], 0
    %9 = vsyncpa [#allocation4], 0
    // Predicated region
    $region2: #{tpu_custom_call.1} parent=1 // pred_check
      _
    $region3: #{tpu_custom_call.1} parent=1 // pred_check_branch
      %11 = sbr.rel (0) target = $region5
    $region4: #{tpu_custom_call.1} parent=1 // pred_region
      %s13 = ssub.s32 128, 128
      %14 = vsyncadd [#allocation3], %s13
      %s16 = sshll.u32 [#allocation2], 4
      %s17 = int_to_ptr.vmem [resolvable:$true] %s16
      %19 = dma.hbm_to_vmem [thread:$0]  %s0, 128, %s17, [#allocation3]
    $region5: #{tpu_custom_call.1} parent=1 // pred_fallthru
      _
    // Predicated region
    $region6: #{tpu_custom_call.1} parent=1 // pred_check
      _
    $region7: #{tpu_custom_call.1} parent=1 // pred_check_branch
      %21 = sbr.rel (0) target = $region9
    $region8: #{tpu_custom_call.1} parent=1 // pred_region
      %s23 = ssub.s32 128, 128
      %24 = vsyncadd [#allocation6], %s23
      %s26 = sshll.u32 [#allocation5], 4
      %s27 = int_to_ptr.vmem [resolvable:$true] %s26
      %29 = dma.hbm_to_vmem [thread:$0]  %s1, 128, %s27, [#allocation6]
    $region9: #{tpu_custom_call.1} parent=1 // pred_fallthru
      _
    // Predicated region
    $region10: #{tpu_custom_call.1} parent=1 // pred_check
      _
    $region11: #{tpu_custom_call.1} parent=1 // pred_check_branch
      %31 = sbr.rel (0) target = $region13
    $region12: #{tpu_custom_call.1} parent=1 // pred_region
      %32 = dma.done [#allocation3], 128
    $region13: #{tpu_custom_call.1} parent=1 // pred_fallthru
      _
    // Predicated region
    $region14: #{tpu_custom_call.1} parent=1 // pred_check
      _
    $region15: #{tpu_custom_call.1} parent=1 // pred_check_branch
      %34 = sbr.rel (0) target = $region17
    $region16: #{tpu_custom_call.1} parent=1 // pred_region
      %35 = dma.done [#allocation6], 128
    $region17: #{tpu_custom_call.1} parent=1 // pred_fallthru
      _
    %v36 = vld [vmem:[#allocation2] sm:$0xff]
    %v37 = vld [vmem:[#allocation5] sm:$0xff]
    %v38 = vlaneseq
    %v39 = vand.u32 %v38, 127
    %40 = vset.pattern.permute.xlu0 0
    %41 = vperm.xlu0 %40, %v37
    %v42 = vpop.permute.xlu0 %41
    %vm43 = vcmp.eq.s32.totalorder %v39, %v42
    %v44 = vsel %vm43, 0.9, 0.0032258064
    %vm45 = vcmask 261120
    %v46 = vsel %vm45, %v36, -inf
    %47 = vmax.xlane.f32.xlu0 %v46
    %v48 = vpop.xlane.xlu0 %47
    %v49 = vmul.f32 %v44, %v36
    %v50 = vsel %vm45, %v49, 0.0
    %51 = vadd.xlane.f32.xlu0 %v50
    %v52 = vpop.xlane.xlu0 %51
    %v53 = vsub.f32 %v36, %v48
    %v54 = vmul.f32 %v53, 1.442695
    %v55 = vpow.pop %v54
    %v56 = vsel %vm45, %v55, 0.0
    %57 = vadd.xlane.f32.xlu0 %v56
    %v58 = vpop.xlane.xlu0 %57
    %v59 = vlog2.pop %v58
    %v60 = vmul.f32 %v59, 0.6931472
    %v61 = vadd.f32 %v48, %v60
    %v62 = vsub.f32 %v61, %v52
    %v63 = vrot.slane %v62, 4
    %v64 = vadd.f32 %v62, %v63
    %v65 = vrot.slane %v64, 2
    %v66 = vadd.f32 %v64, %v65
    %v67 = vrot.slane %v66, 1
    %v68 = vadd.f32 %v66, %v67
    %vm69 = vcmp.eq.s32.totalorder %v39, 0
    %v70 = vsel %vm69, %v68, 0.0
    %71 = vst [vmem:[#allocation7] sm:$0x1] %v70
    // Predicated region
    $region18: #{tpu_custom_call.1} parent=1 // pred_check
      _
    $region19: #{tpu_custom_call.1} parent=1 // pred_check_branch
      %73 = sbr.rel (0) target = $region21
    $region20: #{tpu_custom_call.1} parent=1 // pred_region
      %s75 = ssub.s32 16, 16
      %76 = vsyncadd [#allocation4], %s75
      %s78 = sshll.u32 [#allocation7], 4
      %s79 = int_to_ptr.vmem [resolvable:$true] %s78
      %81 = dma.vmem_to_hbm [thread:$0]  %s79, 16, %s2, [#allocation4]
    $region21: #{tpu_custom_call.1} parent=1 // pred_fallthru
      _
    // Predicated region
    $region22: #{tpu_custom_call.1} parent=1 // pred_check
      _
    $region23: #{tpu_custom_call.1} parent=1 // pred_check_branch
      %83 = sbr.rel (0) target = $region25
    $region24: #{tpu_custom_call.1} parent=1 // pred_region
      %84 = dma.done [#allocation4], 16
    $region25: #{tpu_custom_call.1} parent=1 // pred_fallthru
      _
    %85 = vsyncpa [#allocation3], 1
    %86 = vsyncpa [#allocation6], 1
    %87 = vsyncpa [#allocation4], 1

</llo_original>
